<compile_context>
chip_gen: v7x
topology: tpu7x:2x2x1
jax: 0.10.0
libtpu: 0.0.40
codegen_flags: <defaults>
</compile_context>

<pallas_src>
import jax
import jax.numpy as jnp
from jax import lax
from jax.experimental import pallas as pl
from jax.experimental.pallas import tpu as pltpu


def _round_up(x, m):
    return ((x + m - 1) // m) * m


def _make_critic_kernel(n_seg):
    def kernel(*refs):
        seg_refs = refs[:n_seg]
        w1_refs = refs[n_seg:2 * n_seg]
        b1_ref, w2_ref, b2_ref, w3_ref, b3_ref, o_ref = refs[2 * n_seg:]

        # Layer 1: per-segment MXU dots accumulated in f32 (replaces the
        # concatenated x @ W1; 1/max_action is folded into the W1 slices).
        acc = jnp.dot(seg_refs[0][...].astype(jnp.bfloat16), w1_refs[0][...],
                      preferred_element_type=jnp.float32)
        for s_ref, w_ref in zip(seg_refs[1:], w1_refs[1:]):
            acc = acc + jnp.dot(s_ref[...].astype(jnp.bfloat16), w_ref[...],
                                preferred_element_type=jnp.float32)
        h1 = jnp.maximum(acc + b1_ref[...], 0.0)

        # Layer 2: bf16 MXU operands, f32 accumulate / bias / ReLU.
        h2 = jnp.maximum(
            jnp.dot(h1.astype(jnp.bfloat16), w2_ref[...],
                    preferred_element_type=jnp.float32) + b2_ref[...], 0.0)

        # Layer 3: lane-dense (1, tb) row — w3_row (1, 64) contracted against
        # h2's feature axis.  Dense vector stores + one dense writeback DMA.
        row = lax.dot_general(w3_ref[...], h2, (((1,), (1,)), ((), ())),
                              preferred_element_type=jnp.float32)
        o_ref[0] = row + b3_ref[...]

    return kernel


def critic_forward(state_list, action_list, params, max_action, *, block_b=4096):
    """Pallas-backed Critic forward.

    state_list / action_list: lists of [B, d_i] float arrays.
    params: (w1, b1, w2, b2, w3, b3) with weights laid out [in, out].
    """
    w1, b1, w2, b2, w3, b3 = params
    segs = list(state_list) + list(action_list)
    seg_dims = [int(s.shape[1]) for s in segs]
    n_seg = len(segs)
    n_state = len(state_list)
    batch = int(segs[0].shape[0])
    hidden = int(w2.shape[0])
    assert sum(seg_dims) == int(w1.shape[0]), "W1 rows must match concat width"

    # Split W1 into per-segment row slices; fold 1/max_action into the action
    # slices (exact rewrite since max_action is a scalar).
    inv = 1.0 / float(max_action)
    w1_slices = []
    off = 0
    for k, d in enumerate(seg_dims):
        sl = w1[off:off + d, :]
        if k >= n_state:
            sl = sl * inv
        w1_slices.append(sl.astype(jnp.bfloat16))
        off += d

    # Batch tile: coarse (up to block_b rows), multiple of 8, never larger
    # than the batch, and split into >=2 tiles when possible so the parallel
    # grid axis feeds both TensorCores on v7x.
    block_b = max(8, _round_up(int(block_b), 8))
    if batch <= 8:
        tb = batch                      # single full-extent block
    else:
        target = max(8, min(block_b, _round_up(-(-batch // 2), 8)))
        tb = min(target, (batch // 8) * 8)
    n_tiles = pl.cdiv(batch, tb)

    seg_specs = [pl.BlockSpec((tb, d), lambda i: (i, 0)) for d in seg_dims]
    w1_specs = [pl.BlockSpec((d, hidden), lambda i: (0, 0)) for d in seg_dims]
    const_specs = [
        pl.BlockSpec((1, hidden), lambda i: (0, 0)),        # b1
        pl.BlockSpec((hidden, hidden), lambda i: (0, 0)),   # W2 (resident)
        pl.BlockSpec((1, hidden), lambda i: (0, 0)),        # b2
        pl.BlockSpec((1, hidden), lambda i: (0, 0)),        # w3 as a row
        pl.BlockSpec((1, 1), lambda i: (0, 0)),             # b3
    ]

    out = pl.pallas_call(
        _make_critic_kernel(n_seg),
        out_shape=jax.ShapeDtypeStruct((n_tiles, 1, tb), jnp.float32),
        grid=(n_tiles,),
        in_specs=seg_specs + w1_specs + const_specs,
        out_specs=pl.BlockSpec((1, 1, tb), lambda i: (i, 0, 0)),
        compiler_params=pltpu.CompilerParams(
            dimension_semantics=("parallel",)),              # 2 TCs on v7x
    )(*segs, *w1_slices,
      b1.reshape(1, -1).astype(jnp.float32),
      w2.astype(jnp.bfloat16),
      b2.reshape(1, -1).astype(jnp.float32),
      w3.reshape(1, -1).astype(jnp.float32),
      b3.reshape(1, 1).astype(jnp.float32))

    # Lane-dense (n_tiles, 1, tb) -> (batch, 1); padded tail rows are dropped.
    return out.reshape(-1)[:batch].reshape(batch, 1)


def init_params(key, in_dim, hidden=64):
    """Deterministic synthetic parameters (weights as [in, out])."""
    ks = jax.random.split(key, 6)
    scale = 0.1
    w1 = scale * jax.random.normal(ks[0], (in_dim, hidden), jnp.float32)
    b1 = scale * jax.random.normal(ks[1], (hidden,), jnp.float32)
    w2 = scale * jax.random.normal(ks[2], (hidden, hidden), jnp.float32)
    b2 = scale * jax.random.normal(ks[3], (hidden,), jnp.float32)
    w3 = scale * jax.random.normal(ks[4], (hidden, 1), jnp.float32)
    b3 = scale * jax.random.normal(ks[5], (1,), jnp.float32)
    return (w1, b1, w2, b2, w3, b3)


def _reference(state_list, action_list, params, max_action):
    # Pure f32 JAX reference of the PyTorch forward.
    w1, b1, w2, b2, w3, b3 = params
    state = jnp.concatenate(state_list, axis=1)
    action = jnp.concatenate([a / max_action for a in action_list], axis=1)
    x = jnp.concatenate([state, action], axis=1)
    x = jnp.maximum(x @ w1 + b1, 0.0)
    x = jnp.maximum(x @ w2 + b2, 0.0)
    return x @ w3 + b3


if __name__ == "__main__":
    key = jax.random.PRNGKey(0)

    # Synthetic MADDPG setup: 3 agents, obs_shape=[8,8,8], action_shape=[2,2,2]
    batch = 2
    obs_shape = [8, 8, 8]
    action_shape = [2, 2, 2]
    max_action = 2.0                      # exercises the folded 1/max_action
    in_dim = sum(obs_shape) + sum(action_shape)   # 30

    k_params, k_data = jax.random.split(key)
    params = init_params(k_params, in_dim)

    dkeys = jax.random.split(k_data, len(obs_shape) + len(action_shape))
    state_list = [jax.random.normal(dkeys[i], (batch, d), jnp.float32)
                  for i, d in enumerate(obs_shape)]
    action_list = [jax.random.normal(dkeys[len(obs_shape) + i], (batch, d), jnp.float32)
                   for i, d in enumerate(action_shape)]

    out = jax.block_until_ready(
        critic_forward(state_list, action_list, params, max_action))
    ref = _reference(state_list, action_list, params, max_action)
    assert out.shape == (batch, 1)
    # bf16 MXU operands -> relaxed tolerance vs. f32 reference.
    assert jnp.allclose(out, ref, atol=2e-2, rtol=2e-2), (out, ref)

    # Exercise the multi-tile + ragged-edge path at a replay-buffer batch size
    # (1000 rows -> 2 parallel tiles of 504 rows, second tile partially valid).
    big_batch = 1000
    bkeys = jax.random.split(jax.random.PRNGKey(1), len(obs_shape) + len(action_shape))
    big_state = [jax.random.normal(bkeys[i], (big_batch, d), jnp.float32)
                 for i, d in enumerate(obs_shape)]
    big_action = [jax.random.normal(bkeys[len(obs_shape) + i], (big_batch, d), jnp.float32)
                  for i, d in enumerate(action_shape)]
    big_out = jax.block_until_ready(
        critic_forward(big_state, big_action, params, max_action))
    big_ref = _reference(big_state, big_action, params, max_action)
    assert big_out.shape == (big_batch, 1)
    assert jnp.allclose(big_out, big_ref, atol=2e-2, rtol=2e-2)

    print("KERNEL_OK")
</pallas_src>

<mosaic_0001>
module attributes {stable_mosaic.version = 11 : i64} {
  func.func @kernel(%arg0: i32, %arg1: memref<2x8xf32, #tpu.memory_space<vmem>>, %arg2: memref<2x8xf32, #tpu.memory_space<vmem>>, %arg3: memref<2x8xf32, #tpu.memory_space<vmem>>, %arg4: memref<2x2xf32, #tpu.memory_space<vmem>>, %arg5: memref<2x2xf32, #tpu.memory_space<vmem>>, %arg6: memref<2x2xf32, #tpu.memory_space<vmem>>, %arg7: memref<8x64xbf16, #tpu.memory_space<vmem>>, %arg8: memref<8x64xbf16, #tpu.memory_space<vmem>>, %arg9: memref<8x64xbf16, #tpu.memory_space<vmem>>, %arg10: memref<2x64xbf16, #tpu.memory_space<vmem>>, %arg11: memref<2x64xbf16, #tpu.memory_space<vmem>>, %arg12: memref<2x64xbf16, #tpu.memory_space<vmem>>, %arg13: memref<1x64xf32, #tpu.memory_space<vmem>>, %arg14: memref<64x64xbf16, #tpu.memory_space<vmem>>, %arg15: memref<1x64xf32, #tpu.memory_space<vmem>>, %arg16: memref<1x64xf32, #tpu.memory_space<vmem>>, %arg17: memref<1x1xf32, #tpu.memory_space<vmem>>, %arg18: memref<1x1x2xf32, #tpu.memory_space<vmem>>) attributes {dimension_semantics = [#tpu.dimension_semantics<parallel>], iteration_bounds = array<i64: 1>, scalar_prefetch = 0 : i64, scratch_operands = 0 : i64, tpu.core_type = #tpu.core_type<tc>, window_params = [{transform_indices = @transform_0, window_bounds = array<i64: 2, 8>}, {transform_indices = @transform_1, window_bounds = array<i64: 2, 8>}, {transform_indices = @transform_2, window_bounds = array<i64: 2, 8>}, {transform_indices = @transform_3, window_bounds = array<i64: 2, 2>}, {transform_indices = @transform_4, window_bounds = array<i64: 2, 2>}, {transform_indices = @transform_5, window_bounds = array<i64: 2, 2>}, {pipeline_mode = #tpu.pipeline_mode<synchronous>, transform_indices = @transform_6, window_bounds = array<i64: 8, 64>}, {pipeline_mode = #tpu.pipeline_mode<synchronous>, transform_indices = @transform_7, window_bounds = array<i64: 8, 64>}, {pipeline_mode = #tpu.pipeline_mode<synchronous>, transform_indices = @transform_8, window_bounds = array<i64: 8, 64>}, {pipeline_mode = #tpu.pipeline_mode<synchronous>, transform_indices = @transform_9, window_bounds = array<i64: 2, 64>}, {pipeline_mode = #tpu.pipeline_mode<synchronous>, transform_indices = @transform_10, window_bounds = array<i64: 2, 64>}, {pipeline_mode = #tpu.pipeline_mode<synchronous>, transform_indices = @transform_11, window_bounds = array<i64: 2, 64>}, {pipeline_mode = #tpu.pipeline_mode<synchronous>, transform_indices = @transform_12, window_bounds = array<i64: 1, 64>}, {pipeline_mode = #tpu.pipeline_mode<synchronous>, transform_indices = @transform_13, window_bounds = array<i64: 64, 64>}, {pipeline_mode = #tpu.pipeline_mode<synchronous>, transform_indices = @transform_14, window_bounds = array<i64: 1, 64>}, {pipeline_mode = #tpu.pipeline_mode<synchronous>, transform_indices = @transform_15, window_bounds = array<i64: 1, 64>}, {pipeline_mode = #tpu.pipeline_mode<synchronous>, transform_indices = @transform_16, window_bounds = array<i64: 1, 1>}, {transform_indices = @transform_17, window_bounds = array<i64: 1, 1, 2>}]} {
    %c0 = arith.constant 0 : index
    %c0_0 = arith.constant 0 : index
    %0 = vector.load %arg1[%c0, %c0_0] : memref<2x8xf32, #tpu.memory_space<vmem>>, vector<2x8xf32>
    %1 = arith.truncf %0 : vector<2x8xf32> to vector<2x8xbf16>
    %c0_1 = arith.constant 0 : index
    %c0_2 = arith.constant 0 : index
    %2 = vector.load %arg7[%c0_1, %c0_2] : memref<8x64xbf16, #tpu.memory_space<vmem>>, vector<8x64xbf16>
    %cst = arith.constant dense<0.000000e+00> : vector<2x64xf32>
    %3 = tpu.matmul %1, %2, %cst {dimension_numbers = #tpu.dot_dimension_numbers<[1], [0], [0], [1], [0, 0, 1, 1], [], []>} : vector<2x8xbf16>, vector<8x64xbf16>, vector<2x64xf32> -> vector<2x64xf32>
    %c0_3 = arith.constant 0 : index
    %c0_4 = arith.constant 0 : index
    %4 = vector.load %arg2[%c0_3, %c0_4] : memref<2x8xf32, #tpu.memory_space<vmem>>, vector<2x8xf32>
    %5 = arith.truncf %4 : vector<2x8xf32> to vector<2x8xbf16>
    %c0_5 = arith.constant 0 : index
    %c0_6 = arith.constant 0 : index
    %6 = vector.load %arg8[%c0_5, %c0_6] : memref<8x64xbf16, #tpu.memory_space<vmem>>, vector<8x64xbf16>
    %cst_7 = arith.constant dense<0.000000e+00> : vector<2x64xf32>
    %7 = tpu.matmul %5, %6, %cst_7 {dimension_numbers = #tpu.dot_dimension_numbers<[1], [0], [0], [1], [0, 0, 1, 1], [], []>} : vector<2x8xbf16>, vector<8x64xbf16>, vector<2x64xf32> -> vector<2x64xf32>
    %8 = arith.addf %3, %7 : vector<2x64xf32>
    %c0_8 = arith.constant 0 : index
    %c0_9 = arith.constant 0 : index
    %9 = vector.load %arg3[%c0_8, %c0_9] : memref<2x8xf32, #tpu.memory_space<vmem>>, vector<2x8xf32>
    %10 = arith.truncf %9 : vector<2x8xf32> to vector<2x8xbf16>
    %c0_10 = arith.constant 0 : index
    %c0_11 = arith.constant 0 : index
    %11 = vector.load %arg9[%c0_10, %c0_11] : memref<8x64xbf16, #tpu.memory_space<vmem>>, vector<8x64xbf16>
    %cst_12 = arith.constant dense<0.000000e+00> : vector<2x64xf32>
    %12 = tpu.matmul %10, %11, %cst_12 {dimension_numbers = #tpu.dot_dimension_numbers<[1], [0], [0], [1], [0, 0, 1, 1], [], []>} : vector<2x8xbf16>, vector<8x64xbf16>, vector<2x64xf32> -> vector<2x64xf32>
    %13 = arith.addf %8, %12 : vector<2x64xf32>
    %c0_13 = arith.constant 0 : index
    %c0_14 = arith.constant 0 : index
    %14 = vector.load %arg4[%c0_13, %c0_14] : memref<2x2xf32, #tpu.memory_space<vmem>>, vector<2x2xf32>
    %15 = arith.truncf %14 : vector<2x2xf32> to vector<2x2xbf16>
    %c0_15 = arith.constant 0 : index
    %c0_16 = arith.constant 0 : index
    %16 = vector.load %arg10[%c0_15, %c0_16] : memref<2x64xbf16, #tpu.memory_space<vmem>>, vector<2x64xbf16>
    %cst_17 = arith.constant dense<0.000000e+00> : vector<2x64xf32>
    %17 = tpu.matmul %15, %16, %cst_17 {dimension_numbers = #tpu.dot_dimension_numbers<[1], [0], [0], [1], [0, 0, 1, 1], [], []>} : vector<2x2xbf16>, vector<2x64xbf16>, vector<2x64xf32> -> vector<2x64xf32>
    %18 = arith.addf %13, %17 : vector<2x64xf32>
    %c0_18 = arith.constant 0 : index
    %c0_19 = arith.constant 0 : index
    %19 = vector.load %arg5[%c0_18, %c0_19] : memref<2x2xf32, #tpu.memory_space<vmem>>, vector<2x2xf32>
    %20 = arith.truncf %19 : vector<2x2xf32> to vector<2x2xbf16>
    %c0_20 = arith.constant 0 : index
    %c0_21 = arith.constant 0 : index
    %21 = vector.load %arg11[%c0_20, %c0_21] : memref<2x64xbf16, #tpu.memory_space<vmem>>, vector<2x64xbf16>
    %cst_22 = arith.constant dense<0.000000e+00> : vector<2x64xf32>
    %22 = tpu.matmul %20, %21, %cst_22 {dimension_numbers = #tpu.dot_dimension_numbers<[1], [0], [0], [1], [0, 0, 1, 1], [], []>} : vector<2x2xbf16>, vector<2x64xbf16>, vector<2x64xf32> -> vector<2x64xf32>
    %23 = arith.addf %18, %22 : vector<2x64xf32>
    %c0_23 = arith.constant 0 : index
    %c0_24 = arith.constant 0 : index
    %24 = vector.load %arg6[%c0_23, %c0_24] : memref<2x2xf32, #tpu.memory_space<vmem>>, vector<2x2xf32>
    %25 = arith.truncf %24 : vector<2x2xf32> to vector<2x2xbf16>
    %c0_25 = arith.constant 0 : index
    %c0_26 = arith.constant 0 : index
    %26 = vector.load %arg12[%c0_25, %c0_26] : memref<2x64xbf16, #tpu.memory_space<vmem>>, vector<2x64xbf16>
    %cst_27 = arith.constant dense<0.000000e+00> : vector<2x64xf32>
    %27 = tpu.matmul %25, %26, %cst_27 {dimension_numbers = #tpu.dot_dimension_numbers<[1], [0], [0], [1], [0, 0, 1, 1], [], []>} : vector<2x2xbf16>, vector<2x64xbf16>, vector<2x64xf32> -> vector<2x64xf32>
    %28 = arith.addf %23, %27 : vector<2x64xf32>
    %c0_28 = arith.constant 0 : index
    %c0_29 = arith.constant 0 : index
    %29 = vector.load %arg13[%c0_28, %c0_29] : memref<1x64xf32, #tpu.memory_space<vmem>>, vector<1x64xf32>
    %30 = vector.broadcast %29 : vector<1x64xf32> to vector<2x64xf32>
    %31 = arith.addf %28, %30 : vector<2x64xf32>
    %cst_30 = arith.constant 0.000000e+00 : f32
    %32 = vector.broadcast %cst_30 : f32 to vector<2x64xf32>
    %33 = arith.maximumf %31, %32 : vector<2x64xf32>
    %34 = arith.truncf %33 : vector<2x64xf32> to vector<2x64xbf16>
    %c0_31 = arith.constant 0 : index
    %c0_32 = arith.constant 0 : index
    %35 = vector.load %arg14[%c0_31, %c0_32] : memref<64x64xbf16, #tpu.memory_space<vmem>>, vector<64x64xbf16>
    %cst_33 = arith.constant dense<0.000000e+00> : vector<2x64xf32>
    %36 = tpu.matmul %34, %35, %cst_33 {dimension_numbers = #tpu.dot_dimension_numbers<[1], [0], [0], [1], [0, 0, 1, 1], [], []>} : vector<2x64xbf16>, vector<64x64xbf16>, vector<2x64xf32> -> vector<2x64xf32>
    %c0_34 = arith.constant 0 : index
    %c0_35 = arith.constant 0 : index
    %37 = vector.load %arg15[%c0_34, %c0_35] : memref<1x64xf32, #tpu.memory_space<vmem>>, vector<1x64xf32>
    %38 = vector.broadcast %37 : vector<1x64xf32> to vector<2x64xf32>
    %39 = arith.addf %36, %38 : vector<2x64xf32>
    %cst_36 = arith.constant 0.000000e+00 : f32
    %40 = vector.broadcast %cst_36 : f32 to vector<2x64xf32>
    %41 = arith.maximumf %39, %40 : vector<2x64xf32>
    %c0_37 = arith.constant 0 : index
    %c0_38 = arith.constant 0 : index
    %42 = vector.load %arg16[%c0_37, %c0_38] : memref<1x64xf32, #tpu.memory_space<vmem>>, vector<1x64xf32>
    %cst_39 = arith.constant dense<0.000000e+00> : vector<1x2xf32>
    %43 = tpu.matmul %42, %41, %cst_39 {dimension_numbers = #tpu.dot_dimension_numbers<[1], [1], [0], [0], [0, 0, 1, 0], [], []>} : vector<1x64xf32>, vector<2x64xf32>, vector<1x2xf32> -> vector<1x2xf32>
    %c0_40 = arith.constant 0 : index
    %c0_41 = arith.constant 0 : index
    %44 = vector.load %arg17[%c0_40, %c0_41] : memref<1x1xf32, #tpu.memory_space<vmem>>, vector<1x1xf32>
    %45 = vector.broadcast %44 : vector<1x1xf32> to vector<1x2xf32>
    %46 = arith.addf %43, %45 : vector<1x2xf32>
    %c0_42 = arith.constant 0 : index
    %c0_43 = arith.constant 0 : index
    %c0_44 = arith.constant 0 : index
    %47 = vector.load %arg18[%c0_42, %c0_43, %c0_44] : memref<1x1x2xf32, #tpu.memory_space<vmem>>, vector<1x1x2xf32>
    %48 = vector.shape_cast %47 : vector<1x1x2xf32> to vector<1x2xf32>
    %49 = vector.shape_cast %46 : vector<1x2xf32> to vector<1x1x2xf32>
    tpu.vector_store %arg18[%c0_42, %c0_43, %c0_44], %49 {strides = array<i32>} : memref<1x1x2xf32, #tpu.memory_space<vmem>>, vector<1x1x2xf32>,
    return
  }
  func.func @transform_0(%arg0: i32) -> (i32, i32) {
    %c0_i32 = arith.constant 0 : i32
    %c0_i32_0 = arith.constant 0 : i32
    return %arg0, %c0_i32 : i32, i32
  }
  func.func @transform_1(%arg0: i32) -> (i32, i32) {
    %c0_i32 = arith.constant 0 : i32
    %c0_i32_0 = arith.constant 0 : i32
    return %arg0, %c0_i32 : i32, i32
  }
  func.func @transform_2(%arg0: i32) -> (i32, i32) {
    %c0_i32 = arith.constant 0 : i32
    %c0_i32_0 = arith.constant 0 : i32
    return %arg0, %c0_i32 : i32, i32
  }
  func.func @transform_3(%arg0: i32) -> (i32, i32) {
    %c0_i32 = arith.constant 0 : i32
    %c0_i32_0 = arith.constant 0 : i32
    return %arg0, %c0_i32 : i32, i32
  }
  func.func @transform_4(%arg0: i32) -> (i32, i32) {
    %c0_i32 = arith.constant 0 : i32
    %c0_i32_0 = arith.constant 0 : i32
    return %arg0, %c0_i32 : i32, i32
  }
  func.func @transform_5(%arg0: i32) -> (i32, i32) {
    %c0_i32 = arith.constant 0 : i32
    %c0_i32_0 = arith.constant 0 : i32
    return %arg0, %c0_i32 : i32, i32
  }
  func.func @transform_6(%arg0: i32) -> (i32, i32) {
    %c0_i32 = arith.constant 0 : i32
    %c0_i32_0 = arith.constant 0 : i32
    %c0_i32_1 = arith.constant 0 : i32
    return %c0_i32, %c0_i32_0 : i32, i32
  }
  func.func @transform_7(%arg0: i32) -> (i32, i32) {
    %c0_i32 = arith.constant 0 : i32
    %c0_i32_0 = arith.constant 0 : i32
    %c0_i32_1 = arith.constant 0 : i32
    return %c0_i32, %c0_i32_0 : i32, i32
  }
  func.func @transform_8(%arg0: i32) -> (i32, i32) {
    %c0_i32 = arith.constant 0 : i32
    %c0_i32_0 = arith.constant 0 : i32
    %c0_i32_1 = arith.constant 0 : i32
    return %c0_i32, %c0_i32_0 : i32, i32
  }
  func.func @transform_9(%arg0: i32) -> (i32, i32) {
    %c0_i32 = arith.constant 0 : i32
    %c0_i32_0 = arith.constant 0 : i32
    %c0_i32_1 = arith.constant 0 : i32
    return %c0_i32, %c0_i32_0 : i32, i32
  }
  func.func @transform_10(%arg0: i32) -> (i32, i32) {
    %c0_i32 = arith.constant 0 : i32
    %c0_i32_0 = arith.constant 0 : i32
    %c0_i32_1 = arith.constant 0 : i32
    return %c0_i32, %c0_i32_0 : i32, i32
  }
  func.func @transform_11(%arg0: i32) -> (i32, i32) {
    %c0_i32 = arith.constant 0 : i32
    %c0_i32_0 = arith.constant 0 : i32
    %c0_i32_1 = arith.constant 0 : i32
    return %c0_i32, %c0_i32_0 : i32, i32
  }
  func.func @transform_12(%arg0: i32) -> (i32, i32) {
    %c0_i32 = arith.constant 0 : i32
    %c0_i32_0 = arith.constant 0 : i32
    %c0_i32_1 = arith.constant 0 : i32
    return %c0_i32, %c0_i32_0 : i32, i32
  }
  func.func @transform_13(%arg0: i32) -> (i32, i32) {
    %c0_i32 = arith.constant 0 : i32
    %c0_i32_0 = arith.constant 0 : i32
    %c0_i32_1 = arith.constant 0 : i32
    return %c0_i32, %c0_i32_0 : i32, i32
  }
  func.func @transform_14(%arg0: i32) -> (i32, i32) {
    %c0_i32 = arith.constant 0 : i32
    %c0_i32_0 = arith.constant 0 : i32
    %c0_i32_1 = arith.constant 0 : i32
    return %c0_i32, %c0_i32_0 : i32, i32
  }
  func.func @transform_15(%arg0: i32) -> (i32, i32) {
    %c0_i32 = arith.constant 0 : i32
    %c0_i32_0 = arith.constant 0 : i32
    %c0_i32_1 = arith.constant 0 : i32
    return %c0_i32, %c0_i32_0 : i32, i32
  }
  func.func @transform_16(%arg0: i32) -> (i32, i32) {
    %c0_i32 = arith.constant 0 : i32
    %c0_i32_0 = arith.constant 0 : i32
    %c0_i32_1 = arith.constant 0 : i32
    return %c0_i32, %c0_i32_0 : i32, i32
  }
  func.func @transform_17(%arg0: i32) -> (i32, i32, i32) {
    %c0_i32 = arith.constant 0 : i32
    %c0_i32_0 = arith.constant 0 : i32
    %c0_i32_1 = arith.constant 0 : i32
    return %arg0, %c0_i32, %c0_i32_0 : i32, i32, i32
  }
}

</mosaic_0001>

<llo_original>
// kernel: tpu_custom_call.1
$region0: #{tpu_custom_call.1}
  #allocation0 [shape = 'u32[]', space=smem, size = 0x4, offset = 0x4, fixed_abs, tag = 'smem constant byte address 0x4 - core index']
  #allocation1 [shape = 'u32[144,128]{1,0:T(1,128)}', space=vmem, size = 0x12000, scoped, tag = 'internal scratch']
  #allocation2 [shape = 'f32[1,1]{1,0:T(1,128)S(1)}', space=vmem, size = 0x200, scoped, tag = 'scoped memory for tpu_custom_call.1']
  %s0 = inlined_call_operand.vmem [shape: f32[2,8], index: 0, kind: input, shape index: {}]
  %s1 = inlined_call_operand.hbm [shape: f32[2,8], index: 1, kind: input, shape index: {}]
  %s2 = inlined_call_operand.hbm [shape: f32[2,8], index: 2, kind: input, shape index: {}]
  %s3 = inlined_call_operand.hbm [shape: f32[2,2], index: 3, kind: input, shape index: {}]
  %s4 = inlined_call_operand.vmem [shape: f32[2,2], index: 4, kind: input, shape index: {}]
  %s5 = inlined_call_operand.vmem [shape: f32[2,2], index: 5, kind: input, shape index: {}]
  %s6 = inlined_call_operand.vmem [shape: bf16[8,64], index: 6, kind: input, shape index: {}]
  %s7 = inlined_call_operand.vmem [shape: bf16[8,64], index: 7, kind: input, shape index: {}]
  %s8 = inlined_call_operand.vmem [shape: bf16[8,64], index: 8, kind: input, shape index: {}]
  %s9 = inlined_call_operand.vmem [shape: bf16[2,64], index: 9, kind: input, shape index: {}]
  %s10 = inlined_call_operand.vmem [shape: bf16[2,64], index: 10, kind: input, shape index: {}]
  %s11 = inlined_call_operand.vmem [shape: bf16[2,64], index: 11, kind: input, shape index: {}]
  %s12 = inlined_call_operand.hbm [shape: f32[1,64], index: 12, kind: input, shape index: {}]
  %s13 = inlined_call_operand.vmem [shape: bf16[64,64], index: 13, kind: input, shape index: {}]
  %s14 = inlined_call_operand.vmem [shape: f32[1,64], index: 14, kind: input, shape index: {}]
  %s15 = inlined_call_operand.vmem [shape: f32[1,64], index: 15, kind: input, shape index: {}]
  %s16 = inlined_call_operand.<no memory space> [shape: f32[1,1], index: 16, kind: input, shape index: {}]
  %s17 = inlined_call_operand.hbm [shape: f32[1,1,2], index: 17, kind: output, shape index: {}]
  %s18 = sld [smem:[#allocation0]]
  $region94: #{tpu_custom_call.1} parent=0
    _
  %s20 = ssub.s32 1, %s18
  %s21 = scalar_select 0, %s20, %s18
  %v22 = vstv %s16
  %23 = vst [vmem:[#allocation2] sm:$0x1] %v22
  $region1: #{tpu_custom_call.1} parent=0
    #allocation3 [shape = 'u8[1024]{0}', space=vmem, size = 0x400, scoped, tag = 'input window, operand 1, single buffered']
    #allocation4 [shape = 's32[1]{0}', space=sflag, size = 0x4, scoped, tag = 'scoped memory for tpu_custom_call.1']
    #allocation5 [shape = 's32[1]{0}', space=sflag, size = 0x4, scoped, tag = 'scoped memory for tpu_custom_call.1']
    #allocation6 [shape = 'u8[1024]{0}', space=vmem, size = 0x400, scoped, tag = 'input window, operand 2, single buffered']
    #allocation7 [shape = 's32[1]{0}', space=sflag, size = 0x4, scoped, tag = 'scoped memory for tpu_custom_call.1']
    #allocation8 [shape = 'u8[1024]{0}', space=vmem, size = 0x400, scoped, tag = 'input window, operand 3, single buffered']
    #allocation9 [shape = 'u8[512]{0}', space=vmem, size = 0x400, scoped, tag = 'input window, operand 12, single buffered']
    #allocation10 [shape = 's32[1]{0}', space=sflag, size = 0x4, scoped, tag = 'scoped memory for tpu_custom_call.1']
    #allocation11 [shape = 'u8[512]{0}', space=vmem, size = 0x400, scoped, tag = 'output window, operand 0, single buffered']
    %24 = vsyncpa [#allocation4], 0
    %25 = vsyncpa [#allocation7], 0
    %26 = vsyncpa [#allocation10], 0
    %27 = vsyncpa [#allocation5], 0
    // Predicated region
    $region2: #{tpu_custom_call.1} parent=1 // pred_check
      _
    $region3: #{tpu_custom_call.1} parent=1 // pred_check_branch
      %29 = sbr.rel (0) target = $region5
    $region4: #{tpu_custom_call.1} parent=1 // pred_region
      _
    $region5: #{tpu_custom_call.1} parent=1 // pred_fallthru
      _
    // Predicated region
    $region6: #{tpu_custom_call.1} parent=1 // pred_check
      _
    $region7: #{tpu_custom_call.1} parent=1 // pred_check_branch
      %31 = sbr.rel (0) target = $region9
    $region8: #{tpu_custom_call.1} parent=1 // pred_region
      %s33 = ssub.s32 32, 32
      %34 = vsyncadd [#allocation4], %s33
      %s36 = sshll.u32 [#allocation3], 4
      %s37 = int_to_ptr.vmem [resolvable:$true] %s36
      %39 = dma.hbm_to_vmem [thread:$0]  %s1, 32, %s37, [#allocation4]
    $region9: #{tpu_custom_call.1} parent=1 // pred_fallthru
      _
    // Predicated region
    $region10: #{tpu_custom_call.1} parent=1 // pred_check
      _
    $region11: #{tpu_custom_call.1} parent=1 // pred_check_branch
      %41 = sbr.rel (0) target = $region13
    $region12: #{tpu_custom_call.1} parent=1 // pred_region
      %s43 = ssub.s32 32, 32
      %44 = vsyncadd [#allocation7], %s43
      %s46 = sshll.u32 [#allocation6], 4
      %s47 = int_to_ptr.vmem [resolvable:$true] %s46
      %49 = dma.hbm_to_vmem [thread:$0]  %s2, 32, %s47, [#allocation7]
    $region13: #{tpu_custom_call.1} parent=1 // pred_fallthru
      _
    // Predicated region
    $region14: #{tpu_custom_call.1} parent=1 // pred_check
      _
    $region15: #{tpu_custom_call.1} parent=1 // pred_check_branch
      %51 = sbr.rel (0) target = $region17
    $region16: #{tpu_custom_call.1} parent=1 // pred_region
      %s53 = ssub.s32 32, 32
      %54 = vsyncadd [#allocation7], %s53
      %s56 = sshll.u32 [#allocation8], 4
      %s57 = int_to_ptr.vmem [resolvable:$true] %s56
      %59 = dma.hbm_to_vmem [thread:$0]  %s3, 32, %s57, [#allocation7]
    $region17: #{tpu_custom_call.1} parent=1 // pred_fallthru
      _
    // Predicated region
    $region18: #{tpu_custom_call.1} parent=1 // pred_check
      _
    $region19: #{tpu_custom_call.1} parent=1 // pred_check_branch
      %61 = sbr.rel (0) target = $region21
    $region20: #{tpu_custom_call.1} parent=1 // pred_region
      _
    $region21: #{tpu_custom_call.1} parent=1 // pred_fallthru
      _
    // Predicated region
    $region22: #{tpu_custom_call.1} parent=1 // pred_check
      _
    $region23: #{tpu_custom_call.1} parent=1 // pred_check_branch
      %63 = sbr.rel (0) target = $region25
    $region24: #{tpu_custom_call.1} parent=1 // pred_region
      _
    $region25: #{tpu_custom_call.1} parent=1 // pred_fallthru
      _
    // Predicated region
    $region26: #{tpu_custom_call.1} parent=1 // pred_check
      _
    $region27: #{tpu_custom_call.1} parent=1 // pred_check_branch
      %65 = sbr.rel (0) target = $region29
    $region28: #{tpu_custom_call.1} parent=1 // pred_region
      _
    $region29: #{tpu_custom_call.1} parent=1 // pred_fallthru
      _
    // Predicated region
    $region30: #{tpu_custom_call.1} parent=1 // pred_check
      _
    $region31: #{tpu_custom_call.1} parent=1 // pred_check_branch
      %67 = sbr.rel (0) target = $region33
    $region32: #{tpu_custom_call.1} parent=1 // pred_region
      _
    $region33: #{tpu_custom_call.1} parent=1 // pred_fallthru
      _
    // Predicated region
    $region34: #{tpu_custom_call.1} parent=1 // pred_check
      _
    $region35: #{tpu_custom_call.1} parent=1 // pred_check_branch
      %69 = sbr.rel (0) target = $region37
    $region36: #{tpu_custom_call.1} parent=1 // pred_region
      _
    $region37: #{tpu_custom_call.1} parent=1 // pred_fallthru
      _
    // Predicated region
    $region38: #{tpu_custom_call.1} parent=1 // pred_check
      _
    $region39: #{tpu_custom_call.1} parent=1 // pred_check_branch
      %71 = sbr.rel (0) target = $region41
    $region40: #{tpu_custom_call.1} parent=1 // pred_region
      _
    $region41: #{tpu_custom_call.1} parent=1 // pred_fallthru
      _
    // Predicated region
    $region42: #{tpu_custom_call.1} parent=1 // pred_check
      _
    $region43: #{tpu_custom_call.1} parent=1 // pred_check_branch
      %73 = sbr.rel (0) target = $region45
    $region44: #{tpu_custom_call.1} parent=1 // pred_region
      _
    $region45: #{tpu_custom_call.1} parent=1 // pred_fallthru
      _
    // Predicated region
    $region46: #{tpu_custom_call.1} parent=1 // pred_check
      _
    $region47: #{tpu_custom_call.1} parent=1 // pred_check_branch
      %75 = sbr.rel (0) target = $region49
    $region48: #{tpu_custom_call.1} parent=1 // pred_region
      _
    $region49: #{tpu_custom_call.1} parent=1 // pred_fallthru
      _
    // Predicated region
    $region50: #{tpu_custom_call.1} parent=1 // pred_check
      _
    $region51: #{tpu_custom_call.1} parent=1 // pred_check_branch
      %77 = sbr.rel (0) target = $region53
    $region52: #{tpu_custom_call.1} parent=1 // pred_region
      %s79 = ssub.s32 16, 16
      %80 = vsyncadd [#allocation10], %s79
      %s82 = sshll.u32 [#allocation9], 4
      %s83 = int_to_ptr.vmem [resolvable:$true] %s82
      %85 = dma.hbm_to_vmem [thread:$0]  %s12, 16, %s83, [#allocation10]
    $region53: #{tpu_custom_call.1} parent=1 // pred_fallthru
      _
    // Predicated region
    $region54: #{tpu_custom_call.1} parent=1 // pred_check
      _
    $region55: #{tpu_custom_call.1} parent=1 // pred_check_branch
      %87 = sbr.rel (0) target = $region57
    $region56: #{tpu_custom_call.1} parent=1 // pred_region
      _
    $region57: #{tpu_custom_call.1} parent=1 // pred_fallthru
      _
    // Predicated region
    $region58: #{tpu_custom_call.1} parent=1 // pred_check
      _
    $region59: #{tpu_custom_call.1} parent=1 // pred_check_branch
      %89 = sbr.rel (0) target = $region61
    $region60: #{tpu_custom_call.1} parent=1 // pred_region
      _
    $region61: #{tpu_custom_call.1} parent=1 // pred_fallthru
      _
    // Predicated region
    $region62: #{tpu_custom_call.1} parent=1 // pred_check
      _
    $region63: #{tpu_custom_call.1} parent=1 // pred_check_branch
      %91 = sbr.rel (0) target = $region65
    $region64: #{tpu_custom_call.1} parent=1 // pred_region
      _
    $region65: #{tpu_custom_call.1} parent=1 // pred_fallthru
      _
    // Predicated region
    $region66: #{tpu_custom_call.1} parent=1 // pred_check
      _
    $region67: #{tpu_custom_call.1} parent=1 // pred_check_branch
      %93 = sbr.rel (0) target = $region69
    $region68: #{tpu_custom_call.1} parent=1 // pred_region
      _
    $region69: #{tpu_custom_call.1} parent=1 // pred_fallthru
      _
    // Predicated region
    $region70: #{tpu_custom_call.1} parent=1 // pred_check
      _
    $region71: #{tpu_custom_call.1} parent=1 // pred_check_branch
      %95 = sbr.rel (0) target = $region73
    $region72: #{tpu_custom_call.1} parent=1 // pred_region
      %96 = dma.done [#allocation4], 32
    $region73: #{tpu_custom_call.1} parent=1 // pred_fallthru
      _
    // Predicated region
    $region74: #{tpu_custom_call.1} parent=1 // pred_check
      _
    $region75: #{tpu_custom_call.1} parent=1 // pred_check_branch
      %98 = sbr.rel (0) target = $region77
    $region76: #{tpu_custom_call.1} parent=1 // pred_region
      %99 = dma.done [#allocation7], 32
    $region77: #{tpu_custom_call.1} parent=1 // pred_fallthru
      _
    // Predicated region
    $region78: #{tpu_custom_call.1} parent=1 // pred_check
      _
    $region79: #{tpu_custom_call.1} parent=1 // pred_check_branch
      %101 = sbr.rel (0) target = $region81
    $region80: #{tpu_custom_call.1} parent=1 // pred_region
      %102 = dma.done [#allocation7], 32
    $region81: #{tpu_custom_call.1} parent=1 // pred_fallthru
      _
    // Predicated region
    $region82: #{tpu_custom_call.1} parent=1 // pred_check
      _
    $region83: #{tpu_custom_call.1} parent=1 // pred_check_branch
      %104 = sbr.rel (0) target = $region85
    $region84: #{tpu_custom_call.1} parent=1 // pred_region
      %105 = dma.done [#allocation10], 16
    $region85: #{tpu_custom_call.1} parent=1 // pred_fallthru
      _
    %v107 = vld [vmem:[%s0] sm:$0x3]
    %v108 = vpack.c.bf16 %v107, %v107
    %v109 = vld [vmem:[%s6] sm:$0xf]
    %v110 = vld [vmem:[#allocation3] sm:$0x3]
    %v111 = vpack.c.bf16 %v110, %v110
    %v112 = vld [vmem:[%s7] sm:$0xf]
    %vm113 = vcmask 64512
    %v115 = vsel %vm113, %v111, 0
    %vm117 = vcmask 1043456
    %v119 = vsel %vm117, %v112, 0
    %121 = vmatprep.subr.bf16.mxu0 0
    %122 = vmatpush1.bf16.msra.mxu0 %v119
    %123 = vmatprep.subr.bf16.mxu0 0
    %124 = vmatpush1.bf16.msra.mxu0 0
    %125 = vmatprep.subr.bf16.mxu0 0
    %126 = vmatpush1.bf16.msra.mxu0 0
    %127 = vmatprep.subr.bf16.mxu0 0
    %128 = vmatpush1.bf16.msra.mxu0 0
    %129 = vmatprep.subr.bf16.mxu0 0
    %130 = vmatpush1.bf16.msra.mxu0 0
    %131 = vmatprep.subr.bf16.mxu0 0
    %132 = vmatpush1.bf16.msra.mxu0 0
    %133 = vmatprep.subr.bf16.mxu0 0
    %134 = vmatpush1.bf16.msra.mxu0 0
    %135 = vmatprep.subr.bf16.mxu0 0
    %136 = vmatpush1.bf16.msra.mxu0 0
    %137 = vmatprep.subr.bf16.mxu0 0
    %138 = vmatpush1.bf16.msra.mxu0 0
    %139 = vmatprep.subr.bf16.mxu0 0
    %140 = vmatpush1.bf16.msra.mxu0 0
    %141 = vmatprep.subr.bf16.mxu0 0
    %142 = vmatpush1.bf16.msra.mxu0 0
    %143 = vmatprep.subr.bf16.mxu0 0
    %144 = vmatpush1.bf16.msra.mxu0 0
    %145 = vmatprep.subr.bf16.mxu0 0
    %146 = vmatpush1.bf16.msra.mxu0 0
    %147 = vmatprep.subr.bf16.mxu0 0
    %148 = vmatpush1.bf16.msra.mxu0 0
    %149 = vmatprep.subr.bf16.mxu0 0
    %150 = vmatpush1.bf16.msra.mxu0 0
    %151 = vmatprep.subr.bf16.mxu0 0
    %152 = vmatpush1.bf16.msra.mxu0 0
    %153 = vmatprep.mubr.bf16.mxu0 0
    %154 = vmatmul.mubr.bf16.gmra.mrb[0].mxu0 %v115
    %v155 = vpop.f32.mrb[0].mxu0
    %v156 = vadd.f32 0.0, %v155
    %v157 = vpop.f32.mrb[0].mxu0
    %v158 = vpop.f32.mrb[0].mxu0
    %v159 = vpop.f32.mrb[0].mxu0
    %160 = vdwg.mxu0
    %v162 = vsel %vm113, %v108, 0
    %v165 = vsel %vm117, %v109, 0
    %167 = vmatprep.subr.bf16.mxu0 0
    %168 = vmatpush1.bf16.msra.mxu0 %v165
    %169 = vmatprep.subr.bf16.mxu0 0
    %170 = vmatpush1.bf16.msra.mxu0 0
    %171 = vmatprep.subr.bf16.mxu0 0
    %172 = vmatpush1.bf16.msra.mxu0 0
    %173 = vmatprep.subr.bf16.mxu0 0
    %174 = vmatpush1.bf16.msra.mxu0 0
    %175 = vmatprep.subr.bf16.mxu0 0
    %176 = vmatpush1.bf16.msra.mxu0 0
    %177 = vmatprep.subr.bf16.mxu0 0
    %178 = vmatpush1.bf16.msra.mxu0 0
    %179 = vmatprep.subr.bf16.mxu0 0
    %180 = vmatpush1.bf16.msra.mxu0 0
    %181 = vmatprep.subr.bf16.mxu0 0
    %182 = vmatpush1.bf16.msra.mxu0 0
    %183 = vmatprep.subr.bf16.mxu0 0
    %184 = vmatpush1.bf16.msra.mxu0 0
    %185 = vmatprep.subr.bf16.mxu0 0
    %186 = vmatpush1.bf16.msra.mxu0 0
    %187 = vmatprep.subr.bf16.mxu0 0
    %188 = vmatpush1.bf16.msra.mxu0 0
    %189 = vmatprep.subr.bf16.mxu0 0
    %190 = vmatpush1.bf16.msra.mxu0 0
    %191 = vmatprep.subr.bf16.mxu0 0
    %192 = vmatpush1.bf16.msra.mxu0 0
    %193 = vmatprep.subr.bf16.mxu0 0
    %194 = vmatpush1.bf16.msra.mxu0 0
    %195 = vmatprep.subr.bf16.mxu0 0
    %196 = vmatpush1.bf16.msra.mxu0 0
    %197 = vmatprep.subr.bf16.mxu0 0
    %198 = vmatpush1.bf16.msra.mxu0 0
    %199 = vmatprep.mubr.bf16.mxu0 0
    %200 = vmatmul.mubr.bf16.gmra.mrb[0].mxu0 %v162
    %v201 = vpop.f32.mrb[0].mxu0
    %v202 = vadd.f32 %v156, %v201
    %v203 = vpop.f32.mrb[0].mxu0
    %v204 = vpop.f32.mrb[0].mxu0
    %v205 = vpop.f32.mrb[0].mxu0
    %206 = vdwg.mxu0
    %v207 = vld [vmem:[#allocation6] sm:$0x3]
    %v208 = vpack.c.bf16 %v207, %v207
    %v209 = vld [vmem:[%s8] sm:$0xf]
    %v211 = vsel %vm113, %v208, 0
    %v214 = vsel %vm117, %v209, 0
    %216 = vmatprep.subr.bf16.mxu0 0
    %217 = vmatpush1.bf16.msra.mxu0 %v214
    %218 = vmatprep.subr.bf16.mxu0 0
    %219 = vmatpush1.bf16.msra.mxu0 0
    %220 = vmatprep.subr.bf16.mxu0 0
    %221 = vmatpush1.bf16.msra.mxu0 0
    %222 = vmatprep.subr.bf16.mxu0 0
    %223 = vmatpush1.bf16.msra.mxu0 0
    %224 = vmatprep.subr.bf16.mxu0 0
    %225 = vmatpush1.bf16.msra.mxu0 0
    %226 = vmatprep.subr.bf16.mxu0 0
    %227 = vmatpush1.bf16.msra.mxu0 0
    %228 = vmatprep.subr.bf16.mxu0 0
    %229 = vmatpush1.bf16.msra.mxu0 0
    %230 = vmatprep.subr.bf16.mxu0 0
    %231 = vmatpush1.bf16.msra.mxu0 0
    %232 = vmatprep.subr.bf16.mxu0 0
    %233 = vmatpush1.bf16.msra.mxu0 0
    %234 = vmatprep.subr.bf16.mxu0 0
    %235 = vmatpush1.bf16.msra.mxu0 0
    %236 = vmatprep.subr.bf16.mxu0 0
    %237 = vmatpush1.bf16.msra.mxu0 0
    %238 = vmatprep.subr.bf16.mxu0 0
    %239 = vmatpush1.bf16.msra.mxu0 0
    %240 = vmatprep.subr.bf16.mxu0 0
    %241 = vmatpush1.bf16.msra.mxu0 0
    %242 = vmatprep.subr.bf16.mxu0 0
    %243 = vmatpush1.bf16.msra.mxu0 0
    %244 = vmatprep.subr.bf16.mxu0 0
    %245 = vmatpush1.bf16.msra.mxu0 0
    %246 = vmatprep.subr.bf16.mxu0 0
    %247 = vmatpush1.bf16.msra.mxu0 0
    %248 = vmatprep.mubr.bf16.mxu0 0
    %249 = vmatmul.mubr.bf16.gmra.mrb[0].mxu0 %v211
    %v250 = vpop.f32.mrb[0].mxu0
    %v251 = vadd.f32 0.0, %v250
    %v252 = vpop.f32.mrb[0].mxu0
    %v253 = vpop.f32.mrb[0].mxu0
    %v254 = vpop.f32.mrb[0].mxu0
    %255 = vdwg.mxu0
    %v256 = vadd.f32 %v202, %v251
    %v257 = vld [vmem:[#allocation8] sm:$0x3]
    %v258 = vpack.c.bf16 %v257, %v257
    %v259 = vld [vmem:[%s9] sm:$0x1]
    %vm260 = vcmask 15360
    %v262 = vsel %vm260, %v258, 0
    %vm264 = vcmask 1040384
    %v266 = vsel %vm264, %v259, 0
    %268 = vmatprep.subr.bf16.mxu0 0
    %269 = vmatpush1.bf16.msra.mxu0 %v266
    %270 = vmatprep.subr.bf16.mxu0 0
    %271 = vmatpush1.bf16.msra.mxu0 0
    %272 = vmatprep.subr.bf16.mxu0 0
    %273 = vmatpush1.bf16.msra.mxu0 0
    %274 = vmatprep.subr.bf16.mxu0 0
    %275 = vmatpush1.bf16.msra.mxu0 0
    %276 = vmatprep.subr.bf16.mxu0 0
    %277 = vmatpush1.bf16.msra.mxu0 0
    %278 = vmatprep.subr.bf16.mxu0 0
    %279 = vmatpush1.bf16.msra.mxu0 0
    %280 = vmatprep.subr.bf16.mxu0 0
    %281 = vmatpush1.bf16.msra.mxu0 0
    %282 = vmatprep.subr.bf16.mxu0 0
    %283 = vmatpush1.bf16.msra.mxu0 0
    %284 = vmatprep.subr.bf16.mxu0 0
    %285 = vmatpush1.bf16.msra.mxu0 0
    %286 = vmatprep.subr.bf16.mxu0 0
    %287 = vmatpush1.bf16.msra.mxu0 0
    %288 = vmatprep.subr.bf16.mxu0 0
    %289 = vmatpush1.bf16.msra.mxu0 0
    %290 = vmatprep.subr.bf16.mxu0 0
    %291 = vmatpush1.bf16.msra.mxu0 0
    %292 = vmatprep.subr.bf16.mxu0 0
    %293 = vmatpush1.bf16.msra.mxu0 0
    %294 = vmatprep.subr.bf16.mxu0 0
    %295 = vmatpush1.bf16.msra.mxu0 0
    %296 = vmatprep.subr.bf16.mxu0 0
    %297 = vmatpush1.bf16.msra.mxu0 0
    %298 = vmatprep.subr.bf16.mxu0 0
    %299 = vmatpush1.bf16.msra.mxu0 0
    %300 = vmatprep.mubr.bf16.mxu0 0
    %301 = vmatmul.mubr.bf16.gmra.mrb[0].mxu0 %v262
    %v302 = vpop.f32.mrb[0].mxu0
    %v303 = vadd.f32 0.0, %v302
    %v304 = vpop.f32.mrb[0].mxu0
    %v305 = vpop.f32.mrb[0].mxu0
    %v306 = vpop.f32.mrb[0].mxu0
    %307 = vdwg.mxu0
    %v308 = vadd.f32 %v256, %v303
    %v309 = vld [vmem:[%s4] sm:$0x3]
    %v310 = vpack.c.bf16 %v309, %v309
    %v311 = vld [vmem:[%s10] sm:$0x1]
    %v313 = vsel %vm260, %v310, 0
    %v316 = vsel %vm264, %v311, 0
    %318 = vmatprep.subr.bf16.mxu0 0
    %319 = vmatpush1.bf16.msra.mxu0 %v316
    %320 = vmatprep.subr.bf16.mxu0 0
    %321 = vmatpush1.bf16.msra.mxu0 0
    %322 = vmatprep.subr.bf16.mxu0 0
    %323 = vmatpush1.bf16.msra.mxu0 0
    %324 = vmatprep.subr.bf16.mxu0 0
    %325 = vmatpush1.bf16.msra.mxu0 0
    %326 = vmatprep.subr.bf16.mxu0 0
    %327 = vmatpush1.bf16.msra.mxu0 0
    %328 = vmatprep.subr.bf16.mxu0 0
    %329 = vmatpush1.bf16.msra.mxu0 0
    %330 = vmatprep.subr.bf16.mxu0 0
    %331 = vmatpush1.bf16.msra.mxu0 0
    %332 = vmatprep.subr.bf16.mxu0 0
    %333 = vmatpush1.bf16.msra.mxu0 0
    %334 = vmatprep.subr.bf16.mxu0 0
    %335 = vmatpush1.bf16.msra.mxu0 0
    %336 = vmatprep.subr.bf16.mxu0 0
    %337 = vmatpush1.bf16.msra.mxu0 0
    %338 = vmatprep.subr.bf16.mxu0 0
    %339 = vmatpush1.bf16.msra.mxu0 0
    %340 = vmatprep.subr.bf16.mxu0 0
    %341 = vmatpush1.bf16.msra.mxu0 0
    %342 = vmatprep.subr.bf16.mxu0 0
    %343 = vmatpush1.bf16.msra.mxu0 0
    %344 = vmatprep.subr.bf16.mxu0 0
    %345 = vmatpush1.bf16.msra.mxu0 0
    %346 = vmatprep.subr.bf16.mxu0 0
    %347 = vmatpush1.bf16.msra.mxu0 0
    %348 = vmatprep.subr.bf16.mxu0 0
    %349 = vmatpush1.bf16.msra.mxu0 0
    %350 = vmatprep.mubr.bf16.mxu0 0
    %351 = vmatmul.mubr.bf16.gmra.mrb[0].mxu0 %v313
    %v352 = vpop.f32.mrb[0].mxu0
    %v353 = vadd.f32 0.0, %v352
    %v354 = vpop.f32.mrb[0].mxu0
    %v355 = vpop.f32.mrb[0].mxu0
    %v356 = vpop.f32.mrb[0].mxu0
    %357 = vdwg.mxu0
    %v358 = vadd.f32 %v308, %v353
    %v359 = vld [vmem:[%s5] sm:$0x3]
    %v360 = vpack.c.bf16 %v359, %v359
    %v361 = vld [vmem:[%s11] sm:$0x1]
    %v363 = vsel %vm260, %v360, 0
    %v366 = vsel %vm264, %v361, 0
    %368 = vmatprep.subr.bf16.mxu0 0
    %369 = vmatpush1.bf16.msra.mxu0 %v366
    %370 = vmatprep.subr.bf16.mxu0 0
    %371 = vmatpush1.bf16.msra.mxu0 0
    %372 = vmatprep.subr.bf16.mxu0 0
    %373 = vmatpush1.bf16.msra.mxu0 0
    %374 = vmatprep.subr.bf16.mxu0 0
    %375 = vmatpush1.bf16.msra.mxu0 0
    %376 = vmatprep.subr.bf16.mxu0 0
    %377 = vmatpush1.bf16.msra.mxu0 0
    %378 = vmatprep.subr.bf16.mxu0 0
    %379 = vmatpush1.bf16.msra.mxu0 0
    %380 = vmatprep.subr.bf16.mxu0 0
    %381 = vmatpush1.bf16.msra.mxu0 0
    %382 = vmatprep.subr.bf16.mxu0 0
    %383 = vmatpush1.bf16.msra.mxu0 0
    %384 = vmatprep.subr.bf16.mxu0 0
    %385 = vmatpush1.bf16.msra.mxu0 0
    %386 = vmatprep.subr.bf16.mxu0 0
    %387 = vmatpush1.bf16.msra.mxu0 0
    %388 = vmatprep.subr.bf16.mxu0 0
    %389 = vmatpush1.bf16.msra.mxu0 0
    %390 = vmatprep.subr.bf16.mxu0 0
    %391 = vmatpush1.bf16.msra.mxu0 0
    %392 = vmatprep.subr.bf16.mxu0 0
    %393 = vmatpush1.bf16.msra.mxu0 0
    %394 = vmatprep.subr.bf16.mxu0 0
    %395 = vmatpush1.bf16.msra.mxu0 0
    %396 = vmatprep.subr.bf16.mxu0 0
    %397 = vmatpush1.bf16.msra.mxu0 0
    %398 = vmatprep.subr.bf16.mxu0 0
    %399 = vmatpush1.bf16.msra.mxu0 0
    %400 = vmatprep.mubr.bf16.mxu0 0
    %401 = vmatmul.mubr.bf16.gmra.mrb[0].mxu0 %v363
    %v402 = vpop.f32.mrb[0].mxu0
    %v403 = vadd.f32 0.0, %v402
    %v404 = vpop.f32.mrb[0].mxu0
    %v405 = vpop.f32.mrb[0].mxu0
    %v406 = vpop.f32.mrb[0].mxu0
    %407 = vdwg.mxu0
    %v408 = vadd.f32 %v358, %v403
    %v409 = vld [vmem:[#allocation9] sm:$0x1]
    %v411 = vlaneseq
    %v412 = vshrl.u32 %v411, 7
    %v413 = vsub.s32 0, %v412
    %v414 = vrot.slane %v409, %v413
    %v416 = vadd.f32 %v408, %v414
    %v417 = vmax.f32 %v416, 0.0
    %v418 = vpack.c.bf16 %v417, %v417
    %v419 = vld [vmem:[%s13] sm:$0xf]
    %v420 = vld [vmem:[%s13 + $0x4] sm:$0xf]
    %v421 = vld [vmem:[%s13 + $0x8] sm:$0xf]
    %v422 = vld [vmem:[%s13 + $0xc] sm:$0xf]
    %v423 = vld [vmem:[%s13 + $0x10] sm:$0xf]
    %v424 = vld [vmem:[%s13 + $0x14] sm:$0xf]
    %v425 = vld [vmem:[%s13 + $0x18] sm:$0xf]
    %v426 = vld [vmem:[%s13 + $0x1c] sm:$0xf]
    %v427 = vld [vmem:[%s14] sm:$0x1]
    %v429 = vlaneseq
    %v430 = vshrl.u32 %v429, 7
    %v431 = vsub.s32 0, %v430
    %v432 = vrot.slane %v427, %v431
    %v442 = vunpack.c.l.b16 %v419
    %v443 = vunpack.c.l.b16 %v420
    %v444 = vunpack.c.l.b16 %v421
    %v445 = vunpack.c.l.b16 %v422
    %v446 = vunpack.c.l.b16 %v423
    %v447 = vunpack.c.l.b16 %v424
    %v448 = vunpack.c.l.b16 %v425
    %v449 = vunpack.c.l.b16 %v426
    %v450 = vpack.c.b16 %v443, %v442
    %v451 = vpack.c.b16 %v445, %v444
    %v452 = vpack.c.b16 %v447, %v446
    %v453 = vpack.c.b16 %v449, %v448
    %vm458 = vcmask 523264
    %v460 = vsel %vm458, %v418, 0
    %462 = vmatprep.subr.bf16.mxu0 0
    %463 = vmatpush1.bf16.msra.mxu0 %v450
    %464 = vmatprep.subr.bf16.mxu0 0
    %465 = vmatpush1.bf16.msra.mxu0 %v451
    %466 = vmatprep.subr.bf16.mxu0 0
    %467 = vmatpush1.bf16.msra.mxu0 %v452
    %468 = vmatprep.subr.bf16.mxu0 0
    %469 = vmatpush1.bf16.msra.mxu0 %v453
    %470 = vmatprep.subr.bf16.mxu0 0
    %471 = vmatpush1.bf16.msra.mxu0 0
    %472 = vmatprep.subr.bf16.mxu0 0
    %473 = vmatpush1.bf16.msra.mxu0 0
    %474 = vmatprep.subr.bf16.mxu0 0
    %475 = vmatpush1.bf16.msra.mxu0 0
    %476 = vmatprep.subr.bf16.mxu0 0
    %477 = vmatpush1.bf16.msra.mxu0 0
    %478 = vmatprep.subr.bf16.mxu0 0
    %479 = vmatpush1.bf16.msra.mxu0 0
    %480 = vmatprep.subr.bf16.mxu0 0
    %481 = vmatpush1.bf16.msra.mxu0 0
    %482 = vmatprep.subr.bf16.mxu0 0
    %483 = vmatpush1.bf16.msra.mxu0 0
    %484 = vmatprep.subr.bf16.mxu0 0
    %485 = vmatpush1.bf16.msra.mxu0 0
    %486 = vmatprep.subr.bf16.mxu0 0
    %487 = vmatpush1.bf16.msra.mxu0 0
    %488 = vmatprep.subr.bf16.mxu0 0
    %489 = vmatpush1.bf16.msra.mxu0 0
    %490 = vmatprep.subr.bf16.mxu0 0
    %491 = vmatpush1.bf16.msra.mxu0 0
    %492 = vmatprep.subr.bf16.mxu0 0
    %493 = vmatpush1.bf16.msra.mxu0 0
    %494 = vmatprep.mubr.bf16.mxu0 0
    %495 = vmatmul.mubr.bf16.gmra.mrb[0].mxu0 %v460
    %v496 = vpop.f32.mrb[0].mxu0
    %v497 = vadd.f32 %v432, %v496
    %v498 = vpop.f32.mrb[0].mxu0
    %v499 = vpop.f32.mrb[0].mxu0
    %v500 = vpop.f32.mrb[0].mxu0
    %501 = vdwg.mxu0
    %v502 = vmax.f32 %v497, 0.0
    %v503 = vld [vmem:[%s15] sm:$0x1]
    %v504 = vld [vmem:[#allocation2] sm:$0x1]
    %506 = vset.pattern.permute.xlu0 0
    %507 = vperm.xlu0 %506, %v504
    %v508 = vpop.permute.xlu0 %507
    %v510 = vlaneseq
    %v511 = vshrl.u32 %v510, 7
    %v512 = vsub.s32 0, %v511
    %v513 = vrot.slane %v508, %v512
    %v515 = vsel %vm458, %v503, 0
    %v518 = vsel %vm458, %v502, 0
    %520 = vmatprep.subr.mxu0 0.0
    %521 = vmatpush1.xpose.msra.mxu0 %v518
    %522 = vmatprep.subr.mxu0 0.0
    %523 = vmatpush1.xpose.msra.mxu0 0.0
    %524 = vmatprep.subr.mxu0 0.0
    %525 = vmatpush1.xpose.msra.mxu0 0.0
    %526 = vmatprep.subr.mxu0 0.0
    %527 = vmatpush1.xpose.msra.mxu0 0.0
    %528 = vmatprep.subr.mxu0 0.0
    %529 = vmatpush1.xpose.msra.mxu0 0.0
    %530 = vmatprep.subr.mxu0 0.0
    %531 = vmatpush1.xpose.msra.mxu0 0.0
    %532 = vmatprep.subr.mxu0 0.0
    %533 = vmatpush1.xpose.msra.mxu0 0.0
    %534 = vmatprep.subr.mxu0 0.0
    %535 = vmatpush1.xpose.msra.mxu0 0.0
    %536 = vmatprep.subr.mxu0 0.0
    %537 = vmatpush1.xpose.msra.mxu0 0.0
    %538 = vmatprep.subr.mxu0 0.0
    %539 = vmatpush1.xpose.msra.mxu0 0.0
    %540 = vmatprep.subr.mxu0 0.0
    %541 = vmatpush1.xpose.msra.mxu0 0.0
    %542 = vmatprep.subr.mxu0 0.0
    %543 = vmatpush1.xpose.msra.mxu0 0.0
    %544 = vmatprep.subr.mxu0 0.0
    %545 = vmatpush1.xpose.msra.mxu0 0.0
    %546 = vmatprep.subr.mxu0 0.0
    %547 = vmatpush1.xpose.msra.mxu0 0.0
    %548 = vmatprep.subr.mxu0 0.0
    %549 = vmatpush1.xpose.msra.mxu0 0.0
    %550 = vmatprep.subr.mxu0 0.0
    %551 = vmatpush1.xpose.msra.mxu0 0.0
    %552 = vmatprep.subr.mxu0 0.0
    %553 = vmatpush1.xpose.msra.mxu0 0.0
    %554 = vmatprep.subr.mxu0 0.0
    %555 = vmatpush1.xpose.msra.mxu0 0.0
    %556 = vmatprep.subr.mxu0 0.0
    %557 = vmatpush1.xpose.msra.mxu0 0.0
    %558 = vmatprep.subr.mxu0 0.0
    %559 = vmatpush1.xpose.msra.mxu0 0.0
    %560 = vmatprep.subr.mxu0 0.0
    %561 = vmatpush1.xpose.msra.mxu0 0.0
    %562 = vmatprep.subr.mxu0 0.0
    %563 = vmatpush1.xpose.msra.mxu0 0.0
    %564 = vmatprep.subr.mxu0 0.0
    %565 = vmatpush1.xpose.msra.mxu0 0.0
    %566 = vmatprep.subr.mxu0 0.0
    %567 = vmatpush1.xpose.msra.mxu0 0.0
    %568 = vmatprep.subr.mxu0 0.0
    %569 = vmatpush1.xpose.msra.mxu0 0.0
    %570 = vmatprep.subr.mxu0 0.0
    %571 = vmatpush1.xpose.msra.mxu0 0.0
    %572 = vmatprep.subr.mxu0 0.0
    %573 = vmatpush1.xpose.msra.mxu0 0.0
    %574 = vmatprep.subr.mxu0 0.0
    %575 = vmatpush1.xpose.msra.mxu0 0.0
    %576 = vmatprep.subr.mxu0 0.0
    %577 = vmatpush1.xpose.msra.mxu0 0.0
    %578 = vmatprep.subr.mxu0 0.0
    %579 = vmatpush1.xpose.msra.mxu0 0.0
    %580 = vmatprep.subr.mxu0 0.0
    %581 = vmatpush1.xpose.msra.mxu0 0.0
    %582 = vmatprep.subr.mxu0 0.0
    %583 = vmatpush1.xpose.msra.mxu0 0.0
    %584 = vmatprep.mubr.f32.mxu0 0.0
    %585 = vmatmul.mubr.f32.gmra.mrb[0].mxu0 %v515
    %v586 = vpop.f32.mrb[0].mxu0
    %v587 = vadd.f32 %v513, %v586
    %v588 = vpop.f32.mrb[0].mxu0
    %589 = vdwg.mxu0
    %vm590 = vcmask 8192
    %591 = vst.msk [vmem:[#allocation11] sm:$0x1] %vm590, %v587
    // Predicated region
    $region86: #{tpu_custom_call.1} parent=1 // pred_check
      _
    $region87: #{tpu_custom_call.1} parent=1 // pred_check_branch
      %593 = sbr.rel (0) target = $region89
    $region88: #{tpu_custom_call.1} parent=1 // pred_region
      %s595 = ssub.s32 16, 16
      %596 = vsyncadd [#allocation5], %s595
      %s598 = sshll.u32 [#allocation11], 4
      %s599 = int_to_ptr.vmem [resolvable:$true] %s598
      %601 = dma.vmem_to_hbm [thread:$0]  %s599, 16, %s17, [#allocation5]
    $region89: #{tpu_custom_call.1} parent=1 // pred_fallthru
      _
    // Predicated region
    $region90: #{tpu_custom_call.1} parent=1 // pred_check
      _
    $region91: #{tpu_custom_call.1} parent=1 // pred_check_branch
      %603 = sbr.rel (0) target = $region93
    $region92: #{tpu_custom_call.1} parent=1 // pred_region
      %604 = dma.done [#allocation5], 16
    $region93: #{tpu_custom_call.1} parent=1 // pred_fallthru
      _
    %605 = vsyncpa [#allocation4], 1
    %606 = vsyncpa [#allocation7], 1
    %607 = vsyncpa [#allocation10], 1
    %608 = vsyncpa [#allocation5], 1

</llo_original>
